<compile_context>
chip_gen: v6e
topology: v6e:2x2x1
jax: 0.10.0
libtpu: 0.0.40
codegen_flags: <defaults>
</compile_context>

<pallas_src>
import functools

import jax
import jax.numpy as jnp
from jax import lax
from jax.experimental import pallas as pl
from jax.experimental.pallas import tpu as pltpu


def _round_up(x, m):
    return (x + m - 1) // m * m


def _conv_block_kernel(patches_ref, w_ref, bias_ref, scale_ref, shift_ref, out_ref):
    """One M-tile (TM output rows) per grid step.

    patches_ref : (4*TM, CK)   bf16 im2col patches; 4 pooling positions stacked along rows
    w_ref       : (CK, Coutp)  bf16 conv weight (Coutp = Cout padded to a multiple of 128)
    bias_ref    : (1, Coutp)   f32 conv bias
    scale_ref   : (1, Coutp)   f32 BN scale = gamma / sqrt(running_var + eps)
    shift_ref   : (1, Coutp)   f32 BN shift = beta - running_mean * scale
    out_ref     : (TM, Coutp)  f32 output tile (NHWC rows, lane-dense channels)
    """
    tm = out_ref.shape[0]
    # One long-M MXU push covering all 4 pooling positions of this tile (f32 accumulation).
    y = jnp.dot(patches_ref[...], w_ref[...], preferred_element_type=jnp.float32)
    # MaxPool2d(2): elementwise max of the 4 pooling positions (tile-aligned slices, VPU only).
    y = jnp.maximum(jnp.maximum(y[0 * tm:1 * tm], y[1 * tm:2 * tm]),
                    jnp.maximum(y[2 * tm:3 * tm], y[3 * tm:4 * tm]))
    y = y + bias_ref[...]                      # conv bias (per-channel, commutes with the max)
    y = jnp.maximum(y, 0.0)                    # ReLU
    # TODO(synk): Dropout(0.3) is identity in eval mode; training-mode masking not implemented.
    y = y * scale_ref[...] + shift_ref[...]    # BatchNorm2d (eval mode, running stats)
    out_ref[...] = y.astype(out_ref.dtype)


@functools.partial(jax.jit, static_argnames=("kernel_size", "stride"))
def conv_block_forward(x, w, b, bn_gamma, bn_beta, bn_mean, bn_var,
                       kernel_size=3, stride=2, eps=1e-5):
    """x: (N, Cin, H, W) f32 -> (N, Cout, Hp, Wp) f32 (NCHW, like the PyTorch module)."""
    N, Cin, H, W = x.shape
    Cout = w.shape[0]
    K = kernel_size
    pad = 1
    H_out = (H + 2 * pad - K) // stride + 1
    W_out = (W + 2 * pad - K) // stride + 1
    Hp, Wp = H_out // 2, W_out // 2              # MaxPool2d(2), floor mode
    CK = Cin * K * K

    # ---- tiling --------------------------------------------------------------
    M_total = N * Hp * Wp                        # batch + spatial folded into one M axis
    TM = min(128, _round_up(M_total, 16))        # 4*TM matmul rows per step (>=512 when possible)
    M_pad = _round_up(M_total, TM)
    G = M_pad // TM                              # grid size ("parallel" -> 2 TCs on v7x)
    Coutp = _round_up(Cout, 128)                 # lane-dense output channels

    # ---- glue: im2col patches emitted directly in the kernel layout (bf16) ----
    x_pad = jnp.pad(x, ((0, 0), (0, 0), (pad, pad), (pad, pad)))
    kh_rows = []
    for kh in range(K):
        kw_rows = []
        for kw in range(K):
            sl = x_pad[:, :, kh:kh + stride * (H_out - 1) + 1:stride,
                             kw:kw + stride * (W_out - 1) + 1:stride]
            kw_rows.append(sl)
        kh_rows.append(jnp.stack(kw_rows, axis=2))
    cp = jnp.stack(kh_rows, axis=2)              # (N, Cin, K, K, H_out, W_out)

    pool_slices = []
    for ph in range(2):
        for pw in range(2):
            pool_slices.append(cp[:, :, :, :, ph:ph + 2 * (Hp - 1) + 1:2,
                                              pw:pw + 2 * (Wp - 1) + 1:2])
    pp = jnp.stack(pool_slices, axis=0)          # (4, N, Cin, K, K, Hp, Wp)
    patches = pp.transpose(0, 1, 5, 6, 2, 3, 4).reshape(4, M_total, CK)
    patches = jnp.pad(patches, ((0, 0), (0, M_pad - M_total), (0, 0)))
    # group rows per tile so every grid step reads one contiguous (4*TM, CK) block
    patches = (patches.reshape(4, G, TM, CK)
                       .transpose(1, 0, 2, 3)
                       .reshape(G * 4 * TM, CK)
                       .astype(jnp.bfloat16))
    # TODO(synk): for memory-bound shapes, move the im2col into the kernel (manual DMA of padded
    # NHWC rows via memory_space=pl.ANY) to avoid the HBM round trip of this 2.25x tensor.

    # weight as a lane-dense matmul operand, same (Cin, kh, kw) flattening as the patches
    w_mat = jnp.zeros((CK, Coutp), jnp.bfloat16).at[:, :Cout].set(
        w.reshape(Cout, CK).T.astype(jnp.bfloat16))
    bias2d = jnp.zeros((1, Coutp), jnp.float32).at[:, :Cout].set(b.reshape(1, Cout))
    scale = bn_gamma / jnp.sqrt(bn_var + eps)
    bn_scale = jnp.zeros((1, Coutp), jnp.float32).at[:, :Cout].set(scale.reshape(1, Cout))
    bn_shift = jnp.zeros((1, Coutp), jnp.float32).at[:, :Cout].set(
        (bn_beta - bn_mean * scale).reshape(1, Cout))

    # Per-step VMEM: patches 4*TM*CK*2B (double-buffered) + weight CK*Coutp*2B + out TM*Coutp*4B
    # -> a few MiB at most, comfortably inside the default scoped VMEM limit on v5e/v6e/v7x.
    out = pl.pallas_call(
        _conv_block_kernel,
        out_shape=jax.ShapeDtypeStruct((M_pad, Coutp), jnp.float32),
        grid_spec=pltpu.PrefetchScalarGridSpec(
            num_scalar_prefetch=0,
            grid=(G,),
            in_specs=[
                pl.BlockSpec((4 * TM, CK), lambda m: (m, 0)),
                pl.BlockSpec((CK, Coutp), lambda m: (0, 0)),
                pl.BlockSpec((1, Coutp), lambda m: (0, 0)),
                pl.BlockSpec((1, Coutp), lambda m: (0, 0)),
                pl.BlockSpec((1, Coutp), lambda m: (0, 0)),
            ],
            out_specs=pl.BlockSpec((TM, Coutp), lambda m: (m, 0)),
        ),
        compiler_params=pltpu.CompilerParams(dimension_semantics=("parallel",)),
    )(patches, w_mat, bias2d, bn_scale, bn_shift)

    out = out[:M_total, :Cout].reshape(N, Hp, Wp, Cout)
    # TODO(synk): skip this NCHW transpose when the consumer accepts NHWC (saves an HBM round trip).
    return out.transpose(0, 3, 1, 2)


def _reference(x, w, b, bn_gamma, bn_beta, bn_mean, bn_var, eps=1e-5):
    """Pure-JAX reference of the PyTorch module in eval mode."""
    y = lax.conv_general_dilated(
        x, w, window_strides=(2, 2), padding=((1, 1), (1, 1)),
        dimension_numbers=("NCHW", "OIHW", "NCHW"))
    y = y + b[None, :, None, None]
    y = lax.reduce_window(y, -jnp.inf, lax.max, (1, 1, 2, 2), (1, 1, 2, 2), "VALID")
    y = jnp.maximum(y, 0.0)
    scale = bn_gamma / jnp.sqrt(bn_var + eps)
    shift = bn_beta - bn_mean * scale
    return y * scale[None, :, None, None] + shift[None, :, None, None]


if __name__ == "__main__":
    key = jax.random.PRNGKey(0)
    N, Cin, H, W = 2, 4, 16, 16
    Cout, K = 8, 3

    k1, k2, k3 = jax.random.split(key, 3)
    x = jax.random.normal(k1, (N, Cin, H, W), dtype=jnp.float32)

    # deterministic parameter init (PyTorch-style uniform bound = 1/sqrt(fan_in))
    fan_in = Cin * K * K
    bound = 1.0 / jnp.sqrt(fan_in)
    w = jax.random.uniform(k2, (Cout, Cin, K, K), jnp.float32, -bound, bound)
    b = jax.random.uniform(k3, (Cout,), jnp.float32, -bound, bound)
    bn_gamma = jnp.ones((Cout,), jnp.float32)
    bn_beta = jnp.zeros((Cout,), jnp.float32)
    bn_mean = jnp.zeros((Cout,), jnp.float32)
    bn_var = jnp.ones((Cout,), jnp.float32)

    out = conv_block_forward(x, w, b, bn_gamma, bn_beta, bn_mean, bn_var)
    out = jax.block_until_ready(out)

    ref = _reference(x, w, b, bn_gamma, bn_beta, bn_mean, bn_var)
    assert out.shape == ref.shape, (out.shape, ref.shape)
    # bf16 operands with f32 accumulation -> loosened tolerance vs. the f32 reference
    assert jnp.allclose(out, ref, atol=3e-2, rtol=3e-2), float(jnp.abs(out - ref).max())

    print("KERNEL_OK")
</pallas_src>

<mosaic_0001>
module attributes {stable_mosaic.version = 11 : i64} {
  func.func @_conv_block_kernel(%arg0: i32, %arg1: memref<128x36xbf16, #tpu.memory_space<vmem>>, %arg2: memref<36x128xbf16, #tpu.memory_space<vmem>>, %arg3: memref<1x128xf32, #tpu.memory_space<vmem>>, %arg4: memref<1x128xf32, #tpu.memory_space<vmem>>, %arg5: memref<1x128xf32, #tpu.memory_space<vmem>>, %arg6: memref<32x128xf32, #tpu.memory_space<vmem>>) attributes {dimension_semantics = [#tpu.dimension_semantics<parallel>], iteration_bounds = array<i64: 1>, scalar_prefetch = 0 : i64, scratch_operands = 0 : i64, tpu.core_type = #tpu.core_type<tc>, window_params = [{transform_indices = @transform_0, window_bounds = array<i64: 128, 36>}, {pipeline_mode = #tpu.pipeline_mode<synchronous>, transform_indices = @transform_1, window_bounds = array<i64: 36, 128>}, {pipeline_mode = #tpu.pipeline_mode<synchronous>, transform_indices = @transform_2, window_bounds = array<i64: 1, 128>}, {pipeline_mode = #tpu.pipeline_mode<synchronous>, transform_indices = @transform_3, window_bounds = array<i64: 1, 128>}, {pipeline_mode = #tpu.pipeline_mode<synchronous>, transform_indices = @transform_4, window_bounds = array<i64: 1, 128>}, {transform_indices = @transform_5, window_bounds = array<i64: 32, 128>}]} {
    %c0 = arith.constant 0 : index
    %c0_0 = arith.constant 0 : index
    %0 = vector.load %arg1[%c0, %c0_0] : memref<128x36xbf16, #tpu.memory_space<vmem>>, vector<128x36xbf16>
    %c0_1 = arith.constant 0 : index
    %c0_2 = arith.constant 0 : index
    %1 = vector.load %arg2[%c0_1, %c0_2] : memref<36x128xbf16, #tpu.memory_space<vmem>>, vector<36x128xbf16>
    %cst = arith.constant dense<0.000000e+00> : vector<128x128xf32>
    %2 = tpu.matmul %0, %1, %cst {dimension_numbers = #tpu.dot_dimension_numbers<[1], [0], [0], [1], [0, 0, 1, 1], [], []>} : vector<128x36xbf16>, vector<36x128xbf16>, vector<128x128xf32> -> vector<128x128xf32>
    %3 = vector.extract_strided_slice %2 {offsets = [0, 0], sizes = [32, 128], strides = [1, 1]} : vector<128x128xf32> to vector<32x128xf32>
    %4 = vector.extract_strided_slice %2 {offsets = [32, 0], sizes = [32, 128], strides = [1, 1]} : vector<128x128xf32> to vector<32x128xf32>
    %5 = arith.maximumf %3, %4 : vector<32x128xf32>
    %6 = vector.extract_strided_slice %2 {offsets = [64, 0], sizes = [32, 128], strides = [1, 1]} : vector<128x128xf32> to vector<32x128xf32>
    %7 = vector.extract_strided_slice %2 {offsets = [96, 0], sizes = [32, 128], strides = [1, 1]} : vector<128x128xf32> to vector<32x128xf32>
    %8 = arith.maximumf %6, %7 : vector<32x128xf32>
    %9 = arith.maximumf %5, %8 : vector<32x128xf32>
    %c0_3 = arith.constant 0 : index
    %c0_4 = arith.constant 0 : index
    %10 = vector.load %arg3[%c0_3, %c0_4] : memref<1x128xf32, #tpu.memory_space<vmem>>, vector<1x128xf32>
    %11 = vector.broadcast %10 : vector<1x128xf32> to vector<32x128xf32>
    %12 = arith.addf %9, %11 : vector<32x128xf32>
    %cst_5 = arith.constant 0.000000e+00 : f32
    %13 = vector.broadcast %cst_5 : f32 to vector<32x128xf32>
    %14 = arith.maximumf %12, %13 : vector<32x128xf32>
    %c0_6 = arith.constant 0 : index
    %c0_7 = arith.constant 0 : index
    %15 = vector.load %arg4[%c0_6, %c0_7] : memref<1x128xf32, #tpu.memory_space<vmem>>, vector<1x128xf32>
    %16 = vector.broadcast %15 : vector<1x128xf32> to vector<32x128xf32>
    %17 = arith.mulf %14, %16 : vector<32x128xf32>
    %c0_8 = arith.constant 0 : index
    %c0_9 = arith.constant 0 : index
    %18 = vector.load %arg5[%c0_8, %c0_9] : memref<1x128xf32, #tpu.memory_space<vmem>>, vector<1x128xf32>
    %19 = vector.broadcast %18 : vector<1x128xf32> to vector<32x128xf32>
    %20 = arith.addf %17, %19 : vector<32x128xf32>
    %c0_10 = arith.constant 0 : index
    %c0_11 = arith.constant 0 : index
    %21 = vector.load %arg6[%c0_10, %c0_11] : memref<32x128xf32, #tpu.memory_space<vmem>>, vector<32x128xf32>
    tpu.vector_store %arg6[%c0_10, %c0_11], %20 {strides = array<i32>} : memref<32x128xf32, #tpu.memory_space<vmem>>, vector<32x128xf32>,
    return
  }
  func.func @transform_0(%arg0: i32) -> (i32, i32) {
    %c0_i32 = arith.constant 0 : i32
    %c0_i32_0 = arith.constant 0 : i32
    return %arg0, %c0_i32 : i32, i32
  }
  func.func @transform_1(%arg0: i32) -> (i32, i32) {
    %c0_i32 = arith.constant 0 : i32
    %c0_i32_0 = arith.constant 0 : i32
    %c0_i32_1 = arith.constant 0 : i32
    return %c0_i32, %c0_i32_0 : i32, i32
  }
  func.func @transform_2(%arg0: i32) -> (i32, i32) {
    %c0_i32 = arith.constant 0 : i32
    %c0_i32_0 = arith.constant 0 : i32
    %c0_i32_1 = arith.constant 0 : i32
    return %c0_i32, %c0_i32_0 : i32, i32
  }
  func.func @transform_3(%arg0: i32) -> (i32, i32) {
    %c0_i32 = arith.constant 0 : i32
    %c0_i32_0 = arith.constant 0 : i32
    %c0_i32_1 = arith.constant 0 : i32
    return %c0_i32, %c0_i32_0 : i32, i32
  }
  func.func @transform_4(%arg0: i32) -> (i32, i32) {
    %c0_i32 = arith.constant 0 : i32
    %c0_i32_0 = arith.constant 0 : i32
    %c0_i32_1 = arith.constant 0 : i32
    return %c0_i32, %c0_i32_0 : i32, i32
  }
  func.func @transform_5(%arg0: i32) -> (i32, i32) {
    %c0_i32 = arith.constant 0 : i32
    %c0_i32_0 = arith.constant 0 : i32
    return %arg0, %c0_i32 : i32, i32
  }
}

</mosaic_0001>

<llo_original>
// kernel: conv_block_forward.1
$region0: #{conv_block_forward.1}
  #allocation0 [shape = 'u32[]', space=smem, size = 0x4, offset = 0x4, fixed_abs, tag = 'smem constant byte address 0x4 - core index']
  #allocation1 [shape = 'u32[144,128]{1,0:T(1,128)}', space=vmem, size = 0x12000, scoped, tag = 'internal scratch']
  %s0 = inlined_call_operand.vmem [shape: bf16[128,36], index: 0, kind: input, shape index: {}]
  %s1 = inlined_call_operand.vmem [shape: bf16[36,128], index: 1, kind: input, shape index: {}]
  %s2 = inlined_call_operand.vmem [shape: f32[1,128], index: 2, kind: input, shape index: {}]
  %s3 = inlined_call_operand.vmem [shape: f32[1,128], index: 3, kind: input, shape index: {}]
  %s4 = inlined_call_operand.vmem [shape: f32[1,128], index: 4, kind: input, shape index: {}]
  %s5 = inlined_call_operand.hbm [shape: f32[32,128], index: 5, kind: output, shape index: {}]
  %s6 = sld [smem:[#allocation0]]
  $region30: #{conv_block_forward.1} parent=0
    _
  %s8 = ssub.s32 1, %s6
  %s9 = scalar_select 0, %s8, %s6
  $region1: #{conv_block_forward.1} parent=0
    #allocation2 [shape = 'u8[16384]{0}', space=vmem, size = 0x4000, scoped, tag = 'output window, operand 0, single buffered']
    #allocation3 [shape = 's32[1]{0}', space=sflag, size = 0x4, scoped, tag = 'scoped memory for conv_block_forward.1']
    %10 = vsyncpa [#allocation3], 0
    // Predicated region
    $region2: #{conv_block_forward.1} parent=1 // pred_check
      _
    $region3: #{conv_block_forward.1} parent=1 // pred_check_branch
      %12 = sbr.rel (0) target = $region5
    $region4: #{conv_block_forward.1} parent=1 // pred_region
      _
    $region5: #{conv_block_forward.1} parent=1 // pred_fallthru
      _
    // Predicated region
    $region6: #{conv_block_forward.1} parent=1 // pred_check
      _
    $region7: #{conv_block_forward.1} parent=1 // pred_check_branch
      %14 = sbr.rel (0) target = $region9
    $region8: #{conv_block_forward.1} parent=1 // pred_region
      _
    $region9: #{conv_block_forward.1} parent=1 // pred_fallthru
      _
    // Predicated region
    $region10: #{conv_block_forward.1} parent=1 // pred_check
      _
    $region11: #{conv_block_forward.1} parent=1 // pred_check_branch
      %16 = sbr.rel (0) target = $region13
    $region12: #{conv_block_forward.1} parent=1 // pred_region
      _
    $region13: #{conv_block_forward.1} parent=1 // pred_fallthru
      _
    // Predicated region
    $region14: #{conv_block_forward.1} parent=1 // pred_check
      _
    $region15: #{conv_block_forward.1} parent=1 // pred_check_branch
      %18 = sbr.rel (0) target = $region17
    $region16: #{conv_block_forward.1} parent=1 // pred_region
      _
    $region17: #{conv_block_forward.1} parent=1 // pred_fallthru
      _
    // Predicated region
    $region18: #{conv_block_forward.1} parent=1 // pred_check
      _
    $region19: #{conv_block_forward.1} parent=1 // pred_check_branch
      %20 = sbr.rel (0) target = $region21
    $region20: #{conv_block_forward.1} parent=1 // pred_region
      _
    $region21: #{conv_block_forward.1} parent=1 // pred_fallthru
      _
    %v22 = vld [vmem:[%s0] sm:$0xf]
    %v23 = vld [vmem:[%s0 + $0x4] sm:$0xf]
    %v24 = vld [vmem:[%s0 + $0x8] sm:$0xf]
    %v25 = vld [vmem:[%s0 + $0xc] sm:$0xf]
    %v26 = vld [vmem:[%s0 + $0x10] sm:$0xf]
    %v27 = vld [vmem:[%s0 + $0x14] sm:$0xf]
    %v28 = vld [vmem:[%s0 + $0x18] sm:$0xf]
    %v29 = vld [vmem:[%s0 + $0x1c] sm:$0xf]
    %v30 = vld [vmem:[%s0 + $0x20] sm:$0xf]
    %v31 = vld [vmem:[%s0 + $0x24] sm:$0xf]
    %v32 = vld [vmem:[%s0 + $0x28] sm:$0xf]
    %v33 = vld [vmem:[%s0 + $0x2c] sm:$0xf]
    %v34 = vld [vmem:[%s0 + $0x30] sm:$0xf]
    %v35 = vld [vmem:[%s0 + $0x34] sm:$0xf]
    %v36 = vld [vmem:[%s0 + $0x38] sm:$0xf]
    %v37 = vld [vmem:[%s0 + $0x3c] sm:$0xf]
    %v38 = vld [vmem:[%s1] sm:$0xf]
    %v39 = vld [vmem:[%s1 + $0x4] sm:$0xf]
    %v40 = vld [vmem:[%s1 + $0x8] sm:$0xf]
    %v41 = vld [vmem:[%s1 + $0xc] sm:$0xf]
    %v42 = vld [vmem:[%s1 + $0x10] sm:$0x3]
    %v59 = vunpack.c.l.b16 %v22
    %v60 = vunpack.c.l.b16 %v23
    %v61 = vunpack.c.l.b16 %v24
    %v62 = vunpack.c.l.b16 %v25
    %v63 = vunpack.c.l.b16 %v26
    %v64 = vunpack.c.l.b16 %v27
    %v65 = vunpack.c.l.b16 %v28
    %v66 = vunpack.c.l.b16 %v29
    %v67 = vunpack.c.l.b16 %v30
    %v68 = vunpack.c.l.b16 %v31
    %v69 = vunpack.c.l.b16 %v32
    %v70 = vunpack.c.l.b16 %v33
    %v71 = vunpack.c.l.b16 %v34
    %v72 = vunpack.c.l.b16 %v35
    %v73 = vunpack.c.l.b16 %v36
    %v74 = vunpack.c.l.b16 %v37
    %v75 = vpack.c.b16 %v60, %v59
    %v76 = vpack.c.b16 %v62, %v61
    %v77 = vpack.c.b16 %v64, %v63
    %v78 = vpack.c.b16 %v66, %v65
    %v79 = vpack.c.b16 %v68, %v67
    %v80 = vpack.c.b16 %v70, %v69
    %v81 = vpack.c.b16 %v72, %v71
    %v82 = vpack.c.b16 %v74, %v73
    %v88 = vunpack.c.l.b16 %v38
    %v89 = vunpack.c.l.b16 %v39
    %v90 = vunpack.c.l.b16 %v40
    %v91 = vunpack.c.l.b16 %v41
    %v92 = vunpack.c.l.b16 %v42
    %v93 = vpack.c.b16 %v89, %v88
    %v94 = vpack.c.b16 %v91, %v90
    %v95 = vpack.c.b16 %v92, %v92
    %vm98 = vcmask 293888
    %v100 = vsel %vm98, %v75, 0
    %v103 = vsel %vm98, %v76, 0
    %v106 = vsel %vm98, %v77, 0
    %v109 = vsel %vm98, %v78, 0
    %v112 = vsel %vm98, %v79, 0
    %v115 = vsel %vm98, %v80, 0
    %v118 = vsel %vm98, %v81, 0
    %v121 = vsel %vm98, %v82, 0
    %vm123 = vcmask 1041408
    %v125 = vsel %vm123, %v95, 0
    %127 = vmatprep.subr.bf16.mxu0 0
    %128 = vmatpush1.bf16.msra.mxu0 0
    %129 = vmatprep.subr.bf16.mxu0 0
    %130 = vmatpush1.bf16.msra.mxu0 0
    %131 = vmatprep.subr.bf16.mxu0 0
    %132 = vmatpush1.bf16.msra.mxu0 0
    %133 = vmatprep.subr.bf16.mxu0 0
    %134 = vmatpush1.bf16.msra.mxu0 0
    %135 = vmatprep.subr.bf16.mxu0 0
    %136 = vmatpush1.bf16.msra.mxu0 0
    %137 = vmatprep.subr.bf16.mxu0 0
    %138 = vmatpush1.bf16.msra.mxu0 %v125
    %139 = vmatprep.subr.bf16.mxu0 0
    %140 = vmatpush1.bf16.msra.mxu0 %v94
    %141 = vmatprep.subr.bf16.mxu0 0
    %142 = vmatpush1.bf16.msra.mxu0 %v93
    %143 = vmatprep.subr.bf16.mxu0 0
    %144 = vmatpush2.bf16.msra.mxu0 0
    %145 = vmatprep.subr.bf16.mxu0 0
    %146 = vmatpush2.bf16.msra.mxu0 0
    %147 = vmatprep.subr.bf16.mxu0 0
    %148 = vmatpush2.bf16.msra.mxu0 0
    %149 = vmatprep.subr.bf16.mxu0 0
    %150 = vmatpush2.bf16.msra.mxu0 0
    %151 = vmatprep.subr.bf16.mxu0 0
    %152 = vmatpush2.bf16.msra.mxu0 0
    %153 = vmatprep.subr.bf16.mxu0 0
    %154 = vmatpush2.bf16.msra.mxu0 0
    %155 = vmatprep.subr.bf16.mxu0 0
    %156 = vmatpush2.bf16.msra.mxu0 0
    %157 = vmatprep.subr.bf16.mxu0 0
    %158 = vmatpush2.bf16.msra.mxu0 0
    %159 = vmatprep.mubr.bf16.mxu0 0
    %160 = vmatmul.mubr.bf16.gmra.mxu0 %v100
    %v161 = vpop.f32.mrf.mxu0
    %v162 = vadd.f32 0.0, %v161
    %v163 = vpop.f32.mrf.mxu0
    %v164 = vpop.f32.mrf.mxu0
    %v165 = vadd.f32 0.0, %v164
    %v166 = vpop.f32.mrf.mxu0
    %167 = vmatprep.mubr.bf16.mxu0 0
    %168 = vmatmul.mubr.bf16.gmra.mxu0 %v103
    %v169 = vpop.f32.mrf.mxu0
    %v170 = vadd.f32 0.0, %v169
    %v171 = vpop.f32.mrf.mxu0
    %v172 = vpop.f32.mrf.mxu0
    %v173 = vadd.f32 0.0, %v172
    %v174 = vpop.f32.mrf.mxu0
    %175 = vmatprep.mubr.bf16.mxu0 0
    %176 = vmatmul.mubr.bf16.gmra.mxu0 %v106
    %v177 = vpop.f32.mrf.mxu0
    %v178 = vadd.f32 0.0, %v177
    %v179 = vpop.f32.mrf.mxu0
    %v180 = vpop.f32.mrf.mxu0
    %v181 = vadd.f32 0.0, %v180
    %v182 = vpop.f32.mrf.mxu0
    %183 = vmatprep.mubr.bf16.mxu0 0
    %184 = vmatmul.mubr.bf16.gmra.mxu0 %v109
    %v185 = vpop.f32.mrf.mxu0
    %v186 = vadd.f32 0.0, %v185
    %v187 = vpop.f32.mrf.mxu0
    %v188 = vpop.f32.mrf.mxu0
    %v189 = vadd.f32 0.0, %v188
    %v190 = vpop.f32.mrf.mxu0
    %191 = vmatprep.mubr.bf16.mxu0 0
    %192 = vmatmul.mubr.bf16.gmra.mxu0 %v112
    %v193 = vpop.f32.mrf.mxu0
    %v194 = vadd.f32 0.0, %v193
    %v195 = vpop.f32.mrf.mxu0
    %v196 = vpop.f32.mrf.mxu0
    %v197 = vadd.f32 0.0, %v196
    %v198 = vpop.f32.mrf.mxu0
    %199 = vmatprep.mubr.bf16.mxu0 0
    %200 = vmatmul.mubr.bf16.gmra.mxu0 %v115
    %v201 = vpop.f32.mrf.mxu0
    %v202 = vadd.f32 0.0, %v201
    %v203 = vpop.f32.mrf.mxu0
    %v204 = vpop.f32.mrf.mxu0
    %v205 = vadd.f32 0.0, %v204
    %v206 = vpop.f32.mrf.mxu0
    %207 = vmatprep.mubr.bf16.mxu0 0
    %208 = vmatmul.mubr.bf16.gmra.mxu0 %v118
    %v209 = vpop.f32.mrf.mxu0
    %v210 = vadd.f32 0.0, %v209
    %v211 = vpop.f32.mrf.mxu0
    %v212 = vpop.f32.mrf.mxu0
    %v213 = vadd.f32 0.0, %v212
    %v214 = vpop.f32.mrf.mxu0
    %215 = vmatprep.mubr.bf16.mxu0 0
    %216 = vmatmul.mubr.bf16.gmra.mxu0 %v121
    %v217 = vpop.f32.mrf.mxu0
    %v218 = vadd.f32 0.0, %v217
    %v219 = vpop.f32.mrf.mxu0
    %v220 = vpop.f32.mrf.mxu0
    %v221 = vadd.f32 0.0, %v220
    %v222 = vpop.f32.mrf.mxu0
    %223 = vdwg.mxu0
    %v224 = vmax.f32 %v162, %v178
    %v225 = vmax.f32 %v165, %v181
    %v226 = vmax.f32 %v170, %v186
    %v227 = vmax.f32 %v173, %v189
    %v228 = vmax.f32 %v194, %v210
    %v229 = vmax.f32 %v197, %v213
    %v230 = vmax.f32 %v202, %v218
    %v231 = vmax.f32 %v205, %v221
    %v232 = vmax.f32 %v224, %v228
    %v233 = vmax.f32 %v225, %v229
    %v234 = vmax.f32 %v226, %v230
    %v235 = vmax.f32 %v227, %v231
    %v236 = vld [vmem:[%s2] sm:$0x1]
    %v238 = vlaneseq
    %v239 = vshrl.u32 %v238, 7
    %v240 = vsub.s32 0, %v239
    %v241 = vrot.slane %v236, %v240
    %v243 = vadd.f32 %v232, %v241
    %v244 = vadd.f32 %v233, %v241
    %v245 = vadd.f32 %v234, %v241
    %v246 = vadd.f32 %v235, %v241
    %v247 = vmax.f32 %v243, 0.0
    %v248 = vmax.f32 %v244, 0.0
    %v249 = vmax.f32 %v245, 0.0
    %v250 = vmax.f32 %v246, 0.0
    %v251 = vld [vmem:[%s3] sm:$0x1]
    %v253 = vlaneseq
    %v254 = vshrl.u32 %v253, 7
    %v255 = vsub.s32 0, %v254
    %v256 = vrot.slane %v251, %v255
    %v258 = vmul.f32 %v247, %v256
    %v259 = vmul.f32 %v248, %v256
    %v260 = vmul.f32 %v249, %v256
    %v261 = vmul.f32 %v250, %v256
    %v262 = vld [vmem:[%s4] sm:$0x1]
    %v264 = vlaneseq
    %v265 = vshrl.u32 %v264, 7
    %v266 = vsub.s32 0, %v265
    %v267 = vrot.slane %v262, %v266
    %v269 = vadd.f32 %v258, %v267
    %v270 = vadd.f32 %v259, %v267
    %v271 = vadd.f32 %v260, %v267
    %v272 = vadd.f32 %v261, %v267
    %273 = vst [vmem:[#allocation2] sm:$0xff] %v269
    %274 = vst [vmem:[#allocation2 + $0x8] sm:$0xff] %v270
    %275 = vst [vmem:[#allocation2 + $0x10] sm:$0xff] %v271
    %276 = vst [vmem:[#allocation2 + $0x18] sm:$0xff] %v272
    // Predicated region
    $region22: #{conv_block_forward.1} parent=1 // pred_check
      _
    $region23: #{conv_block_forward.1} parent=1 // pred_check_branch
      %278 = sbr.rel (0) target = $region25
    $region24: #{conv_block_forward.1} parent=1 // pred_region
      %s280 = ssub.s32 512, 512
      %281 = vsyncadd [#allocation3], %s280
      %s282 = sshll.u32 [#allocation2], 4
      %s283 = int_to_ptr.vmem [resolvable:$true] %s282
      %288 = dma.vmem_to_hbm [thread:$0]  %s283, 512, %s5, [#allocation3], 128, 128, 8
    $region25: #{conv_block_forward.1} parent=1 // pred_fallthru
      _
    // Predicated region
    $region26: #{conv_block_forward.1} parent=1 // pred_check
      _
    $region27: #{conv_block_forward.1} parent=1 // pred_check_branch
      %290 = sbr.rel (0) target = $region29
    $region28: #{conv_block_forward.1} parent=1 // pred_region
      %291 = dma.done [#allocation3], 512
    $region29: #{conv_block_forward.1} parent=1 // pred_fallthru
      _
    %292 = vsyncpa [#allocation3], 1

</llo_original>
